<compile_context>
chip_gen: v6e
topology: v6e:2x2x1
jax: 0.10.0
libtpu: 0.0.40
codegen_flags: <defaults>
</compile_context>

<pallas_src>
import functools

import jax
import jax.numpy as jnp
from jax.experimental import pallas as pl
from jax.experimental.pallas import tpu as pltpu


def _deepfm_kernel(x2_ref, slab_ref, scal_ref, w1_ref, w2_ref, out_ref, *,
                   B, S, F, H0, H1, out_pad):
    x2 = x2_ref[...]                                   # (M, F) f32
    M = B * S

    # ---- unpack the fused small-parameter slab (static slices, no extra DMA streams) ----
    wlin = slab_ref[0:1, :F]                           # fm_linear.weight   (1, F)
    b1   = slab_ref[1:2, :H0]                          # dnn[0].bias        (1, H0)
    b2   = slab_ref[2:3, :H1]                          # dnn[3].bias        (1, H1)
    w3   = slab_ref[3:4, :H1]                          # dnn[6].weight      (1, H1)
    emb  = slab_ref[8:8 + S, :F]                       # fm_embedding rows  (S, F)
    blin = scal_ref[0]                                 # fm_linear.bias (scalar, SMEM)
    b3   = scal_ref[1]                                 # dnn[6].bias    (scalar, SMEM)

    # ---- FM first-order: Linear(F, 1) as VPU multiply + lane reduce ----
    lin = jnp.sum(x2 * wlin, axis=-1, keepdims=True) + blin          # (M, 1)

    # ---- FM second-order interactions (need the (B, S, F) view of x) ----
    x3 = x2.reshape(B, S, F)                           # in-VMEM view of the same rows
    xe = x3 * emb[None, :, :]                          # (B, S, F)
    t1 = jnp.sum(xe, axis=1)                           # (B, F)
    t2 = jnp.sum(xe * xe, axis=1)                      # (B, F)   ((x*e)^2 == x^2 * e^2)
    inter = jnp.sum(t1 * t1 - t2, axis=-1, keepdims=True)            # (B, 1)
    # torch broadcast semantics: fm[b, s] = lin[b, s] + 0.5 * inter[s]  (requires B == S).
    # Row m = b*S + s, so the addend for row m is inter[m % S]; B == S makes tile exact.
    fm = lin + 0.5 * jnp.tile(inter, (M // S, 1))      # (M, 1)

    # ---- DNN: two wide dots on the MXU (bf16 operands, f32 accumulation) ----
    h = jnp.dot(x2.astype(w1_ref.dtype), w1_ref[...],
                preferred_element_type=jnp.float32) + b1
    h = jnp.maximum(h, 0.0)                            # ReLU (Dropout = identity, eval mode)
    h = jnp.dot(h.astype(w2_ref.dtype), w2_ref[...],
                preferred_element_type=jnp.float32) + b2
    h = jnp.maximum(h, 0.0)
    # Final Linear(H1, 1) again as a VPU lane reduce; its bias comes from SMEM.
    d = jnp.sum(h * w3, axis=-1, keepdims=True) + b3   # (M, 1)
    dnn = jax.nn.sigmoid(d)

    # ---- final output, stored as one lane-dense 128-lane-padded row (unmasked store) ----
    result = jax.nn.sigmoid(fm + dnn)                  # (M, 1)
    row = result[:, 0][None, :]                        # (1, M)
    if out_pad > M:
        row = jnp.concatenate(
            [row, jnp.zeros((1, out_pad - M), jnp.float32)], axis=1)
    out_ref[...] = row                                 # (1, out_pad)


def deepfm_forward(x, params, *, use_bf16_mxu=True):
    B, S, F = x.shape
    if B != S:
        raise ValueError("DeepFM.forward broadcast requires batch == x.size(1)")
    wlin_row, blin, emb_rows, w1, b1, w2, b2, w3_row, b3 = params
    assert emb_rows.shape == (S, F), "pass fm_embedding rows for arange(S)"
    assert S <= F, "fm_embedding only has F rows (requires x.size(1) <= 10)"
    H0 = w1.shape[1]
    H1 = w2.shape[1]
    M = B * S

    # Wrapper-side layout plumbing (free / tiny XLA ops):
    x2 = x.reshape(M, F)                               # flatten rows outside the kernel
    mxu_dtype = jnp.bfloat16 if use_bf16_mxu else jnp.float32
    w1c = w1.astype(mxu_dtype)
    w2c = w2.astype(mxu_dtype)

    # Fuse the small f32 parameters into one VMEM slab => one DMA stream instead of five.
    W = ((max(F, H0, H1) + 127) // 128) * 128
    s_pad = ((S + 7) // 8) * 8
    R = 8 + s_pad
    slab = jnp.zeros((R, W), jnp.float32)
    slab = slab.at[0, :F].set(wlin_row[0])             # fm_linear.weight
    slab = slab.at[1, :H0].set(b1[0])                  # dnn[0].bias
    slab = slab.at[2, :H1].set(b2[0])                  # dnn[3].bias
    slab = slab.at[3, :H1].set(w3_row[0])              # dnn[6].weight
    slab = slab.at[8:8 + S, :F].set(emb_rows)          # fm_embedding(arange(S))
    # The two width-1 biases ride together in one tiny 1-D SMEM array (8 B, not 2x4 KiB).
    scalars = jnp.concatenate([blin.reshape(1), b3.reshape(1)])

    PAD = ((M + 127) // 128) * 128                     # lane-dense padded output row

    operands = (x2, slab, scalars, w1c, w2c)
    bytes_accessed = sum(int(a.size) * a.dtype.itemsize for a in operands) + PAD * 4
    cost = pl.CostEstimate(
        flops=int(2 * M * (F * H0 + H0 * H1) + 8 * B * S * F + 4 * M * (F + H1)),
        transcendentals=int(2 * M),
        bytes_accessed=int(bytes_accessed),
    )

    kernel = functools.partial(
        _deepfm_kernel, B=B, S=S, F=F, H0=H0, H1=H1, out_pad=PAD)

    out2d = pl.pallas_call(
        kernel,
        out_shape=jax.ShapeDtypeStruct((1, PAD), jnp.float32),
        grid=(1,),   # feasible sizes give M <= 100 rows: one step, everything resident
        in_specs=[
            pl.BlockSpec((M, F), lambda i: (0, 0)),             # x rows (single block)
            pl.BlockSpec((R, W), lambda i: (0, 0)),             # packed small-parameter slab
            pl.BlockSpec(memory_space=pltpu.MemorySpace.SMEM),  # (blin, b3) scalars
            pl.BlockSpec((F, H0), lambda i: (0, 0)),            # W1 (bf16)
            pl.BlockSpec((H0, H1), lambda i: (0, 0)),           # W2 (bf16)
        ],
        out_specs=pl.BlockSpec((1, PAD), lambda i: (0, 0)),     # lane-dense padded row
        compiler_params=pltpu.CompilerParams(dimension_semantics=("arbitrary",)),
        cost_estimate=cost,
    )(*operands)

    return out2d[:, :M].reshape(B, S, 1)


def deepfm_ref(x, params):
    """Pure-JAX reference mirroring the PyTorch forward (eval mode), f32 throughout."""
    wlin_row, blin, emb_rows, w1, b1, w2, b2, w3_row, b3 = params
    linear_part = x @ wlin_row.T + blin                                       # (B, S, 1)
    t1 = jnp.sum(x * emb_rows[None], axis=1, keepdims=True) ** 2              # (B, 1, 10)
    t2 = jnp.sum((x ** 2) * (emb_rows ** 2)[None], axis=1, keepdims=True)     # (B, 1, 10)
    inter = jnp.sum(t1 - t2, axis=2)                                          # (B, 1)
    fm_part = linear_part + 0.5 * inter            # torch broadcast: addend indexed by S axis
    h = jax.nn.relu(x @ w1 + b1)
    h = jax.nn.relu(h @ w2 + b2)
    dnn_part = jax.nn.sigmoid(h @ w3_row.T + b3)
    return jax.nn.sigmoid(fm_part + dnn_part)


def make_params(key, F, S, hidden_dims):
    h0, h1 = hidden_dims
    ks = jax.random.split(key, 9)
    scale = 0.1
    # Layouts correspond to the PyTorch module's parameters (Linear weights pre-transposed
    # where needed; the two width-1 layers are kept as rows for the VPU reduces).
    wlin_row = jax.random.normal(ks[0], (1, F), jnp.float32) * scale     # fm_linear.weight (1, F)
    blin     = jax.random.normal(ks[1], (1, 1), jnp.float32) * scale     # fm_linear.bias
    emb_tbl  = jax.random.normal(ks[2], (F, 10), jnp.float32) * scale    # fm_embedding.weight
    w1       = jax.random.normal(ks[3], (F, h0), jnp.float32) * scale    # dnn[0].weight.T
    b1       = jax.random.normal(ks[4], (1, h0), jnp.float32) * scale
    w2       = jax.random.normal(ks[5], (h0, h1), jnp.float32) * scale   # dnn[3].weight.T
    b2       = jax.random.normal(ks[6], (1, h1), jnp.float32) * scale
    w3_row   = jax.random.normal(ks[7], (1, h1), jnp.float32) * scale    # dnn[6].weight (1, h1)
    b3       = jax.random.normal(ks[8], (1, 1), jnp.float32) * scale
    emb_rows = emb_tbl[:S]                                               # fm_embedding(arange(S))
    return (wlin_row, blin, emb_rows, w1, b1, w2, b2, w3_row, b3)


if __name__ == "__main__":
    embedding_dim = 4                  # only value for which the forward type-checks (F = 10)
    F = embedding_dim * 2 + 2          # 10 == FM embedding width == num_embeddings
    hidden_dims = (128, 64)            # module defaults
    B = S = 8                          # module requires B == S and S <= 10

    key = jax.random.PRNGKey(0)
    kx, kp = jax.random.split(key)
    x = jax.random.normal(kx, (B, S, F), jnp.float32)
    params = make_params(kp, F, S, hidden_dims)

    # f32 MXU path: exact check against the pure-JAX / PyTorch-equivalent reference.
    out_f32 = deepfm_forward(x, params, use_bf16_mxu=False)
    jax.block_until_ready(out_f32)
    ref = deepfm_ref(x, params)
    assert out_f32.shape == (B, S, 1)
    assert float(jnp.max(jnp.abs(out_f32 - ref))) < 1e-5, "f32 kernel mismatch vs reference"

    # bf16-operand MXU path (default): looser tolerance vs the f32 reference.
    out = deepfm_forward(x, params, use_bf16_mxu=True)
    jax.block_until_ready(out)
    assert out.shape == (B, S, 1)
    max_err = float(jnp.max(jnp.abs(out - ref)))
    assert max_err < 1e-2, f"bf16 kernel mismatch vs reference: {max_err}"

    print("KERNEL_OK")
</pallas_src>

<mosaic_0001>
module attributes {stable_mosaic.version = 11 : i64} {
  func.func @_deepfm_kernel(%arg0: i32, %arg1: memref<64x10xf32, #tpu.memory_space<vmem>>, %arg2: memref<16x128xf32, #tpu.memory_space<vmem>>, %arg3: memref<2xf32, #tpu.memory_space<smem>>, %arg4: memref<10x128xf32, #tpu.memory_space<vmem>>, %arg5: memref<128x64xf32, #tpu.memory_space<vmem>>, %arg6: memref<1x128xf32, #tpu.memory_space<vmem>>) attributes {dimension_semantics = [#tpu.dimension_semantics<arbitrary>], iteration_bounds = array<i64: 1>, scalar_prefetch = 0 : i64, scratch_operands = 0 : i64, tpu.core_type = #tpu.core_type<tc>, window_params = [{pipeline_mode = #tpu.pipeline_mode<synchronous>, transform_indices = @transform_0, window_bounds = array<i64: 64, 10>}, {pipeline_mode = #tpu.pipeline_mode<synchronous>, transform_indices = @transform_1, window_bounds = array<i64: 16, 128>}, {transform_indices = @transform_2, window_bounds = array<i64: 2>}, {pipeline_mode = #tpu.pipeline_mode<synchronous>, transform_indices = @transform_3, window_bounds = array<i64: 10, 128>}, {pipeline_mode = #tpu.pipeline_mode<synchronous>, transform_indices = @transform_4, window_bounds = array<i64: 128, 64>}, {pipeline_mode = #tpu.pipeline_mode<synchronous>, transform_indices = @transform_5, window_bounds = array<i64: 1, 128>}]} {
    %c0 = arith.constant 0 : index
    %c0_0 = arith.constant 0 : index
    %0 = vector.load %arg1[%c0, %c0_0] : memref<64x10xf32, #tpu.memory_space<vmem>>, vector<64x10xf32>
    %c0_1 = arith.constant 0 : index
    %c0_2 = arith.constant 0 : index
    %1 = vector.load %arg2[%c0_1, %c0_2] : memref<16x128xf32, #tpu.memory_space<vmem>>, vector<1x10xf32>
    %c1 = arith.constant 1 : index
    %c0_3 = arith.constant 0 : index
    %2 = vector.load %arg2[%c1, %c0_3] : memref<16x128xf32, #tpu.memory_space<vmem>>, vector<1x128xf32>
    %c2 = arith.constant 2 : index
    %c0_4 = arith.constant 0 : index
    %3 = vector.load %arg2[%c2, %c0_4] : memref<16x128xf32, #tpu.memory_space<vmem>>, vector<1x64xf32>
    %c3 = arith.constant 3 : index
    %c0_5 = arith.constant 0 : index
    %4 = vector.load %arg2[%c3, %c0_5] : memref<16x128xf32, #tpu.memory_space<vmem>>, vector<1x64xf32>
    %c8 = arith.constant 8 : index
    %c0_6 = arith.constant 0 : index
    %5 = vector.load %arg2[%c8, %c0_6] : memref<16x128xf32, #tpu.memory_space<vmem>>, vector<8x10xf32>
    %c0_7 = arith.constant 0 : index
    %6 = memref.load %arg3[%c0_7] : memref<2xf32, #tpu.memory_space<smem>>
    %c1_8 = arith.constant 1 : index
    %7 = memref.load %arg3[%c1_8] : memref<2xf32, #tpu.memory_space<smem>>
    %8 = vector.broadcast %1 : vector<1x10xf32> to vector<64x10xf32>
    %9 = arith.mulf %0, %8 : vector<64x10xf32>
    %cst = arith.constant dense<0.000000e+00> : vector<64xf32>
    %10 = vector.multi_reduction <add>, %9, %cst [1] : vector<64x10xf32> to vector<64xf32>
    %11 = vector.shape_cast %10 : vector<64xf32> to vector<64x1xf32>
    %12 = vector.broadcast %6 : f32 to vector<64x1xf32>
    %13 = arith.addf %11, %12 : vector<64x1xf32>
    %14 = vector.shape_cast %0 : vector<64x10xf32> to vector<8x8x10xf32>
    %15 = vector.shape_cast %5 : vector<8x10xf32> to vector<1x8x10xf32>
    %16 = vector.broadcast %15 : vector<1x8x10xf32> to vector<8x8x10xf32>
    %17 = arith.mulf %14, %16 : vector<8x8x10xf32>
    %cst_9 = arith.constant dense<0.000000e+00> : vector<8x10xf32>
    %18 = vector.multi_reduction <add>, %17, %cst_9 [1] : vector<8x8x10xf32> to vector<8x10xf32>
    %19 = arith.mulf %17, %17 : vector<8x8x10xf32>
    %cst_10 = arith.constant dense<0.000000e+00> : vector<8x10xf32>
    %20 = vector.multi_reduction <add>, %19, %cst_10 [1] : vector<8x8x10xf32> to vector<8x10xf32>
    %21 = arith.mulf %18, %18 : vector<8x10xf32>
    %22 = arith.subf %21, %20 : vector<8x10xf32>
    %cst_11 = arith.constant dense<0.000000e+00> : vector<8xf32>
    %23 = vector.multi_reduction <add>, %22, %cst_11 [1] : vector<8x10xf32> to vector<8xf32>
    %24 = vector.shape_cast %23 : vector<8xf32> to vector<8x1xf32>
    %25 = tpu.concatenate %24, %24, %24, %24, %24, %24, %24, %24 in 0 : vector<8x1xf32>, vector<8x1xf32>, vector<8x1xf32>, vector<8x1xf32>, vector<8x1xf32>, vector<8x1xf32>, vector<8x1xf32>, vector<8x1xf32> -> vector<64x1xf32>
    %cst_12 = arith.constant 5.000000e-01 : f32
    %26 = vector.broadcast %cst_12 : f32 to vector<64x1xf32>
    %27 = arith.mulf %26, %25 : vector<64x1xf32>
    %28 = arith.addf %13, %27 : vector<64x1xf32>
    %c0_13 = arith.constant 0 : index
    %c0_14 = arith.constant 0 : index
    %29 = vector.load %arg4[%c0_13, %c0_14] : memref<10x128xf32, #tpu.memory_space<vmem>>, vector<10x128xf32>
    %cst_15 = arith.constant dense<0.000000e+00> : vector<64x128xf32>
    %30 = tpu.matmul %0, %29, %cst_15 {dimension_numbers = #tpu.dot_dimension_numbers<[1], [0], [0], [1], [0, 0, 1, 1], [], []>} : vector<64x10xf32>, vector<10x128xf32>, vector<64x128xf32> -> vector<64x128xf32>
    %31 = vector.broadcast %2 : vector<1x128xf32> to vector<64x128xf32>
    %32 = arith.addf %30, %31 : vector<64x128xf32>
    %cst_16 = arith.constant 0.000000e+00 : f32
    %33 = vector.broadcast %cst_16 : f32 to vector<64x128xf32>
    %34 = arith.maximumf %32, %33 : vector<64x128xf32>
    %c0_17 = arith.constant 0 : index
    %c0_18 = arith.constant 0 : index
    %35 = vector.load %arg5[%c0_17, %c0_18] : memref<128x64xf32, #tpu.memory_space<vmem>>, vector<128x64xf32>
    %cst_19 = arith.constant dense<0.000000e+00> : vector<64x64xf32>
    %36 = tpu.matmul %34, %35, %cst_19 {dimension_numbers = #tpu.dot_dimension_numbers<[1], [0], [0], [1], [0, 0, 1, 1], [], []>} : vector<64x128xf32>, vector<128x64xf32>, vector<64x64xf32> -> vector<64x64xf32>
    %37 = vector.broadcast %3 : vector<1x64xf32> to vector<64x64xf32>
    %38 = arith.addf %36, %37 : vector<64x64xf32>
    %cst_20 = arith.constant 0.000000e+00 : f32
    %39 = vector.broadcast %cst_20 : f32 to vector<64x64xf32>
    %40 = arith.maximumf %38, %39 : vector<64x64xf32>
    %41 = vector.broadcast %4 : vector<1x64xf32> to vector<64x64xf32>
    %42 = arith.mulf %40, %41 : vector<64x64xf32>
    %cst_21 = arith.constant dense<0.000000e+00> : vector<64xf32>
    %43 = vector.multi_reduction <add>, %42, %cst_21 [1] : vector<64x64xf32> to vector<64xf32>
    %44 = vector.shape_cast %43 : vector<64xf32> to vector<64x1xf32>
    %45 = vector.broadcast %7 : f32 to vector<64x1xf32>
    %46 = arith.addf %44, %45 : vector<64x1xf32>
    %47 = arith.negf %46 : vector<64x1xf32>
    %48 = math.exp %47 : vector<64x1xf32>
    %cst_22 = arith.constant 1.000000e+00 : f32
    %49 = vector.broadcast %cst_22 : f32 to vector<64x1xf32>
    %50 = arith.addf %49, %48 : vector<64x1xf32>
    %51 = arith.divf %49, %50 : vector<64x1xf32>
    %52 = arith.addf %28, %51 : vector<64x1xf32>
    %53 = arith.negf %52 : vector<64x1xf32>
    %54 = math.exp %53 : vector<64x1xf32>
    %cst_23 = arith.constant 1.000000e+00 : f32
    %55 = vector.broadcast %cst_23 : f32 to vector<64x1xf32>
    %56 = arith.addf %55, %54 : vector<64x1xf32>
    %57 = arith.divf %55, %56 : vector<64x1xf32>
    %58 = vector.shape_cast %57 : vector<64x1xf32> to vector<64xf32>
    %59 = vector.shape_cast %58 : vector<64xf32> to vector<1x64xf32>
    %cst_24 = arith.constant 0.000000e+00 : f32
    %60 = vector.broadcast %cst_24 : f32 to vector<1x64xf32>
    %61 = tpu.concatenate %59, %60 in 1 : vector<1x64xf32>, vector<1x64xf32> -> vector<1x128xf32>
    %c0_25 = arith.constant 0 : index
    %c0_26 = arith.constant 0 : index
    %62 = vector.load %arg6[%c0_25, %c0_26] : memref<1x128xf32, #tpu.memory_space<vmem>>, vector<1x128xf32>
    tpu.vector_store %arg6[%c0_25, %c0_26], %61 {strides = array<i32>} : memref<1x128xf32, #tpu.memory_space<vmem>>, vector<1x128xf32>,
    return
  }
  func.func @transform_0(%arg0: i32) -> (i32, i32) {
    %c0_i32 = arith.constant 0 : i32
    %c0_i32_0 = arith.constant 0 : i32
    %c0_i32_1 = arith.constant 0 : i32
    return %c0_i32, %c0_i32_0 : i32, i32
  }
  func.func @transform_1(%arg0: i32) -> (i32, i32) {
    %c0_i32 = arith.constant 0 : i32
    %c0_i32_0 = arith.constant 0 : i32
    %c0_i32_1 = arith.constant 0 : i32
    return %c0_i32, %c0_i32_0 : i32, i32
  }
  func.func @transform_2(%arg0: i32) -> i32 {
    %c0_i32 = arith.constant 0 : i32
    %c0_i32_0 = arith.constant 0 : i32
    return %c0_i32 : i32
  }
  func.func @transform_3(%arg0: i32) -> (i32, i32) {
    %c0_i32 = arith.constant 0 : i32
    %c0_i32_0 = arith.constant 0 : i32
    %c0_i32_1 = arith.constant 0 : i32
    return %c0_i32, %c0_i32_0 : i32, i32
  }
  func.func @transform_4(%arg0: i32) -> (i32, i32) {
    %c0_i32 = arith.constant 0 : i32
    %c0_i32_0 = arith.constant 0 : i32
    %c0_i32_1 = arith.constant 0 : i32
    return %c0_i32, %c0_i32_0 : i32, i32
  }
  func.func @transform_5(%arg0: i32) -> (i32, i32) {
    %c0_i32 = arith.constant 0 : i32
    %c0_i32_0 = arith.constant 0 : i32
    %c0_i32_1 = arith.constant 0 : i32
    return %c0_i32, %c0_i32_0 : i32, i32
  }
}

</mosaic_0001>

<llo_original>
// kernel: tpu_custom_call.1
$region0: #{tpu_custom_call.1}
  #allocation0 [shape = 'u32[]', space=smem, size = 0x4, offset = 0x4, fixed_abs, tag = 'smem constant byte address 0x4 - core index']
  #allocation1 [shape = 'u32[144,128]{1,0:T(1,128)}', space=vmem, size = 0x12000, scoped, tag = 'internal scratch']
  %s0 = inlined_call_operand.vmem [shape: f32[64,10], index: 0, kind: input, shape index: {}]
  %s1 = inlined_call_operand.vmem [shape: f32[16,128], index: 1, kind: input, shape index: {}]
  %s2 = inlined_call_operand.vmem [shape: f32[2], index: 2, kind: input, shape index: {}]
  %s3 = inlined_call_operand.vmem [shape: f32[10,128], index: 3, kind: input, shape index: {}]
  %s4 = inlined_call_operand.vmem [shape: f32[128,64], index: 4, kind: input, shape index: {}]
  %s5 = inlined_call_operand.hbm [shape: f32[1,128], index: 5, kind: output, shape index: {}]
  %s6 = sld [smem:[#allocation0]]
  $region34: #{tpu_custom_call.1} parent=0
    _
  %s8 = ssub.s32 1, %s6
  %s9 = scalar_select 0, %s8, %s6
  $region1: #{tpu_custom_call.1} parent=0
    #allocation2 [shape = 'u8[512]{0}', space=smem, size = 0x200, scoped, tag = 'input window, operand 2, single buffered']
    #allocation3 [shape = 's32[1]{0}', space=sflag, size = 0x4, scoped, tag = 'scoped memory for tpu_custom_call.1']
    #allocation4 [shape = 's32[1]{0}', space=sflag, size = 0x4, scoped, tag = 'scoped memory for tpu_custom_call.1']
    #allocation5 [shape = 'u8[512]{0}', space=vmem, size = 0x400, scoped, tag = 'output window, operand 0, single buffered']
    %10 = vsyncpa [#allocation4], 0
    %11 = vsyncpa [#allocation3], 0
    // Predicated region
    $region2: #{tpu_custom_call.1} parent=1 // pred_check
      _
    $region3: #{tpu_custom_call.1} parent=1 // pred_check_branch
      %13 = sbr.rel (0) target = $region5
    $region4: #{tpu_custom_call.1} parent=1 // pred_region
      _
    $region5: #{tpu_custom_call.1} parent=1 // pred_fallthru
      _
    // Predicated region
    $region6: #{tpu_custom_call.1} parent=1 // pred_check
      _
    $region7: #{tpu_custom_call.1} parent=1 // pred_check_branch
      %15 = sbr.rel (0) target = $region9
    $region8: #{tpu_custom_call.1} parent=1 // pred_region
      _
    $region9: #{tpu_custom_call.1} parent=1 // pred_fallthru
      _
    // Predicated region
    $region10: #{tpu_custom_call.1} parent=1 // pred_check
      _
    $region11: #{tpu_custom_call.1} parent=1 // pred_check_branch
      %17 = sbr.rel (0) target = $region13
    $region12: #{tpu_custom_call.1} parent=1 // pred_region
      %s19 = ssub.s32 16, 16
      %20 = vsyncadd [#allocation4], %s19
      %s22 = sshll.u32 %s2, 4
      %s23 = int_to_ptr.vmem [resolvable:$true] %s22
      %25 = dma.vmem_to_smem %s23, 16, [#allocation2], [#allocation4]
    $region13: #{tpu_custom_call.1} parent=1 // pred_fallthru
      _
    // Predicated region
    $region14: #{tpu_custom_call.1} parent=1 // pred_check
      _
    $region15: #{tpu_custom_call.1} parent=1 // pred_check_branch
      %27 = sbr.rel (0) target = $region17
    $region16: #{tpu_custom_call.1} parent=1 // pred_region
      _
    $region17: #{tpu_custom_call.1} parent=1 // pred_fallthru
      _
    // Predicated region
    $region18: #{tpu_custom_call.1} parent=1 // pred_check
      _
    $region19: #{tpu_custom_call.1} parent=1 // pred_check_branch
      %29 = sbr.rel (0) target = $region21
    $region20: #{tpu_custom_call.1} parent=1 // pred_region
      _
    $region21: #{tpu_custom_call.1} parent=1 // pred_fallthru
      _
    // Predicated region
    $region22: #{tpu_custom_call.1} parent=1 // pred_check
      _
    $region23: #{tpu_custom_call.1} parent=1 // pred_check_branch
      %31 = sbr.rel (0) target = $region25
    $region24: #{tpu_custom_call.1} parent=1 // pred_region
      %32 = dma.done [#allocation4], 16
    $region25: #{tpu_custom_call.1} parent=1 // pred_fallthru
      _
    %33 = sfence
    %v34 = vld [vmem:[%s0] sm:$0xff]
    %v35 = vld [vmem:[%s0 + $0x8] sm:$0xff]
    %v36 = vld [vmem:[%s0 + $0x10] sm:$0xff]
    %v37 = vld [vmem:[%s0 + $0x18] sm:$0xff]
    %v38 = vld [vmem:[%s0 + $0x20] sm:$0xff]
    %v39 = vld [vmem:[%s0 + $0x28] sm:$0xff]
    %v40 = vld [vmem:[%s0 + $0x30] sm:$0xff]
    %v41 = vld [vmem:[%s0 + $0x38] sm:$0xff]
    %v42 = vld [vmem:[%s1] sm:$0x1]
    %v43 = vld [vmem:[%s1 + $0x1] sm:$0x1]
    %v44 = vld [vmem:[%s1 + $0x2] sm:$0x1]
    %v45 = vld [vmem:[%s1 + $0x3] sm:$0x1]
    %v46 = vld [vmem:[%s1 + $0x8] sm:$0xff]
    %s47 = sld [smem:[#allocation2]]
    %s48 = sld [smem:[#allocation2 + $0x1]]
    %v49 = vlaneseq
    %v50 = vshrl.u32 %v49, 7
    %v51 = vsub.s32 0, %v50
    %v52 = vrot.slane %v42, %v51
    %v53 = vmul.f32 %v34, %v52
    %v54 = vmul.f32 %v35, %v52
    %v55 = vmul.f32 %v36, %v52
    %v56 = vmul.f32 %v37, %v52
    %v57 = vmul.f32 %v38, %v52
    %v58 = vmul.f32 %v39, %v52
    %v59 = vmul.f32 %v40, %v52
    %v60 = vmul.f32 %v41, %v52
    %vm61 = vcmask 80896
    %v62 = vsel %vm61, %v53, 0.0
    %63 = vadd.xlane.f32.xlu0 %v62
    %v64 = vpop.xlane.xlu0 %63
    %v65 = vsel %vm61, %v54, 0.0
    %66 = vadd.xlane.f32.xlu0 %v65
    %v67 = vpop.xlane.xlu0 %66
    %v68 = vsel %vm61, %v55, 0.0
    %69 = vadd.xlane.f32.xlu0 %v68
    %v70 = vpop.xlane.xlu0 %69
    %v71 = vsel %vm61, %v56, 0.0
    %72 = vadd.xlane.f32.xlu0 %v71
    %v73 = vpop.xlane.xlu0 %72
    %v74 = vsel %vm61, %v57, 0.0
    %75 = vadd.xlane.f32.xlu0 %v74
    %v76 = vpop.xlane.xlu0 %75
    %v77 = vsel %vm61, %v58, 0.0
    %78 = vadd.xlane.f32.xlu0 %v77
    %v79 = vpop.xlane.xlu0 %78
    %v80 = vsel %vm61, %v59, 0.0
    %81 = vadd.xlane.f32.xlu0 %v80
    %v82 = vpop.xlane.xlu0 %81
    %v83 = vsel %vm61, %v60, 0.0
    %84 = vadd.xlane.f32.xlu0 %v83
    %v85 = vpop.xlane.xlu0 %84
    %v86 = vstv %s47
    %v87 = vadd.f32 %v64, %v86
    %v88 = vadd.f32 %v67, %v86
    %v89 = vadd.f32 %v70, %v86
    %v90 = vadd.f32 %v73, %v86
    %v91 = vadd.f32 %v76, %v86
    %v92 = vadd.f32 %v79, %v86
    %v93 = vadd.f32 %v82, %v86
    %v94 = vadd.f32 %v85, %v86
    %v95 = vmul.f32 %v34, %v46
    %v96 = vmul.f32 %v35, %v46
    %v97 = vmul.f32 %v36, %v46
    %v98 = vmul.f32 %v37, %v46
    %v99 = vmul.f32 %v38, %v46
    %v100 = vmul.f32 %v39, %v46
    %v101 = vmul.f32 %v40, %v46
    %v102 = vmul.f32 %v41, %v46
    %v103 = vsel %vm61, %v95, 0.0
    %v104 = vrot.slane %v103, 4
    %v105 = vadd.f32 %v103, %v104
    %v106 = vrot.slane %v105, 2
    %v107 = vadd.f32 %v105, %v106
    %v108 = vrot.slane %v107, 1
    %v109 = vadd.f32 %v107, %v108
    %v110 = vsel %vm61, %v96, 0.0
    %v111 = vrot.slane %v110, 4
    %v112 = vadd.f32 %v110, %v111
    %v113 = vrot.slane %v112, 2
    %v114 = vadd.f32 %v112, %v113
    %v115 = vrot.slane %v114, 1
    %v116 = vadd.f32 %v114, %v115
    %v117 = vsel %vm61, %v97, 0.0
    %v118 = vrot.slane %v117, 4
    %v119 = vadd.f32 %v117, %v118
    %v120 = vrot.slane %v119, 2
    %v121 = vadd.f32 %v119, %v120
    %v122 = vrot.slane %v121, 1
    %v123 = vadd.f32 %v121, %v122
    %v124 = vsel %vm61, %v98, 0.0
    %v125 = vrot.slane %v124, 4
    %v126 = vadd.f32 %v124, %v125
    %v127 = vrot.slane %v126, 2
    %v128 = vadd.f32 %v126, %v127
    %v129 = vrot.slane %v128, 1
    %v130 = vadd.f32 %v128, %v129
    %v131 = vsel %vm61, %v99, 0.0
    %v132 = vrot.slane %v131, 4
    %v133 = vadd.f32 %v131, %v132
    %v134 = vrot.slane %v133, 2
    %v135 = vadd.f32 %v133, %v134
    %v136 = vrot.slane %v135, 1
    %v137 = vadd.f32 %v135, %v136
    %v138 = vsel %vm61, %v100, 0.0
    %v139 = vrot.slane %v138, 4
    %v140 = vadd.f32 %v138, %v139
    %v141 = vrot.slane %v140, 2
    %v142 = vadd.f32 %v140, %v141
    %v143 = vrot.slane %v142, 1
    %v144 = vadd.f32 %v142, %v143
    %v145 = vsel %vm61, %v101, 0.0
    %v146 = vrot.slane %v145, 4
    %v147 = vadd.f32 %v145, %v146
    %v148 = vrot.slane %v147, 2
    %v149 = vadd.f32 %v147, %v148
    %v150 = vrot.slane %v149, 1
    %v151 = vadd.f32 %v149, %v150
    %v152 = vsel %vm61, %v102, 0.0
    %v153 = vrot.slane %v152, 4
    %v154 = vadd.f32 %v152, %v153
    %v155 = vrot.slane %v154, 2
    %v156 = vadd.f32 %v154, %v155
    %v157 = vrot.slane %v156, 1
    %v158 = vadd.f32 %v156, %v157
    %v159 = vmul.f32 %v95, %v95
    %v160 = vmul.f32 %v96, %v96
    %v161 = vmul.f32 %v97, %v97
    %v162 = vmul.f32 %v98, %v98
    %v163 = vmul.f32 %v99, %v99
    %v164 = vmul.f32 %v100, %v100
    %v165 = vmul.f32 %v101, %v101
    %v166 = vmul.f32 %v102, %v102
    %v167 = vsel %vm61, %v159, 0.0
    %v168 = vrot.slane %v167, 4
    %v169 = vadd.f32 %v167, %v168
    %v170 = vrot.slane %v169, 2
    %v171 = vadd.f32 %v169, %v170
    %v172 = vrot.slane %v171, 1
    %v173 = vadd.f32 %v171, %v172
    %v174 = vsel %vm61, %v160, 0.0
    %v175 = vrot.slane %v174, 4
    %v176 = vadd.f32 %v174, %v175
    %v177 = vrot.slane %v176, 2
    %v178 = vadd.f32 %v176, %v177
    %v179 = vrot.slane %v178, 1
    %v180 = vadd.f32 %v178, %v179
    %v181 = vsel %vm61, %v161, 0.0
    %v182 = vrot.slane %v181, 4
    %v183 = vadd.f32 %v181, %v182
    %v184 = vrot.slane %v183, 2
    %v185 = vadd.f32 %v183, %v184
    %v186 = vrot.slane %v185, 1
    %v187 = vadd.f32 %v185, %v186
    %v188 = vsel %vm61, %v162, 0.0
    %v189 = vrot.slane %v188, 4
    %v190 = vadd.f32 %v188, %v189
    %v191 = vrot.slane %v190, 2
    %v192 = vadd.f32 %v190, %v191
    %v193 = vrot.slane %v192, 1
    %v194 = vadd.f32 %v192, %v193
    %v195 = vsel %vm61, %v163, 0.0
    %v196 = vrot.slane %v195, 4
    %v197 = vadd.f32 %v195, %v196
    %v198 = vrot.slane %v197, 2
    %v199 = vadd.f32 %v197, %v198
    %v200 = vrot.slane %v199, 1
    %v201 = vadd.f32 %v199, %v200
    %v202 = vsel %vm61, %v164, 0.0
    %v203 = vrot.slane %v202, 4
    %v204 = vadd.f32 %v202, %v203
    %v205 = vrot.slane %v204, 2
    %v206 = vadd.f32 %v204, %v205
    %v207 = vrot.slane %v206, 1
    %v208 = vadd.f32 %v206, %v207
    %v209 = vsel %vm61, %v165, 0.0
    %v210 = vrot.slane %v209, 4
    %v211 = vadd.f32 %v209, %v210
    %v212 = vrot.slane %v211, 2
    %v213 = vadd.f32 %v211, %v212
    %v214 = vrot.slane %v213, 1
    %v215 = vadd.f32 %v213, %v214
    %v216 = vsel %vm61, %v166, 0.0
    %v217 = vrot.slane %v216, 4
    %v218 = vadd.f32 %v216, %v217
    %v219 = vrot.slane %v218, 2
    %v220 = vadd.f32 %v218, %v219
    %v221 = vrot.slane %v220, 1
    %v222 = vadd.f32 %v220, %v221
    %v223 = vmul.f32 %v109, %v109
    %v224 = vmul.f32 %v116, %v116
    %v225 = vmul.f32 %v123, %v123
    %v226 = vmul.f32 %v130, %v130
    %v227 = vmul.f32 %v137, %v137
    %v228 = vmul.f32 %v144, %v144
    %v229 = vmul.f32 %v151, %v151
    %v230 = vmul.f32 %v158, %v158
    %v231 = vsub.f32 %v223, %v173
    %v232 = vsub.f32 %v224, %v180
    %v233 = vsub.f32 %v225, %v187
    %v234 = vsub.f32 %v226, %v194
    %v235 = vsub.f32 %v227, %v201
    %v236 = vsub.f32 %v228, %v208
    %v237 = vsub.f32 %v229, %v215
    %v238 = vsub.f32 %v230, %v222
    %vm247 = vcmask 1041409
    %v248 = vsel %vm247, %v232, %v231
    %vm249 = vcmask 1042434
    %v250 = vsel %vm249, %v233, %v248
    %vm251 = vcmask 1043459
    %v252 = vsel %vm251, %v234, %v250
    %vm253 = vcmask 1044484
    %v254 = vsel %vm253, %v235, %v252
    %vm255 = vcmask 1045509
    %v256 = vsel %vm255, %v236, %v254
    %vm257 = vcmask 1046534
    %v258 = vsel %vm257, %v237, %v256
    %vm259 = vcmask 1047559
    %v260 = vsel %vm259, %v238, %v258
    %v262 = vsel %vm61, %v260, 0.0
    %263 = vadd.xlane.f32.xlu0 %v262
    %v264 = vpop.xlane.xlu0 %263
    %v265 = vmul.f32 %v264, 0.5
    %v266 = vadd.f32 %v87, %v265
    %v267 = vadd.f32 %v88, %v265
    %v268 = vadd.f32 %v89, %v265
    %v269 = vadd.f32 %v90, %v265
    %v270 = vadd.f32 %v91, %v265
    %v271 = vadd.f32 %v92, %v265
    %v272 = vadd.f32 %v93, %v265
    %v273 = vadd.f32 %v94, %v265
    %v274 = vld [vmem:[%s3] sm:$0xff]
    %v275 = vld [vmem:[%s3 + $0x8] sm:$0x3]
    %v276 = vlaneseq
    %v277 = vshrl.u32 %v276, 7
    %v278 = vsub.s32 0, %v277
    %v279 = vrot.slane %v43, %v278
    %v281 = vsel %vm61, %v34, 0
    %v284 = vsel %vm61, %v35, 0
    %v287 = vsel %vm61, %v36, 0
    %v290 = vsel %vm61, %v37, 0
    %v293 = vsel %vm61, %v38, 0
    %v296 = vsel %vm61, %v39, 0
    %v299 = vsel %vm61, %v40, 0
    %v302 = vsel %vm61, %v41, 0
    %vm304 = vcmask 1041408
    %v306 = vsel %vm304, %v275, 0
    %308 = vmatprep.subr.mxu0 0.0
    %309 = vmatpush1.msra.mxu0 0.0
    %310 = vmatprep.subr.mxu0 0.0
    %311 = vmatpush1.msra.mxu0 0.0
    %312 = vmatprep.subr.mxu0 0.0
    %313 = vmatpush1.msra.mxu0 0.0
    %314 = vmatprep.subr.mxu0 0.0
    %315 = vmatpush1.msra.mxu0 0.0
    %316 = vmatprep.subr.mxu0 0.0
    %317 = vmatpush1.msra.mxu0 0.0
    %318 = vmatprep.subr.mxu0 0.0
    %319 = vmatpush1.msra.mxu0 0.0
    %320 = vmatprep.subr.mxu0 0.0
    %321 = vmatpush1.msra.mxu0 0.0
    %322 = vmatprep.subr.mxu0 0.0
    %323 = vmatpush1.msra.mxu0 0.0
    %324 = vmatprep.subr.mxu0 0.0
    %325 = vmatpush1.msra.mxu0 0.0
    %326 = vmatprep.subr.mxu0 0.0
    %327 = vmatpush1.msra.mxu0 0.0
    %328 = vmatprep.subr.mxu0 0.0
    %329 = vmatpush1.msra.mxu0 0.0
    %330 = vmatprep.subr.mxu0 0.0
    %331 = vmatpush1.msra.mxu0 0.0
    %332 = vmatprep.subr.mxu0 0.0
    %333 = vmatpush1.msra.mxu0 0.0
    %334 = vmatprep.subr.mxu0 0.0
    %335 = vmatpush1.msra.mxu0 0.0
    %336 = vmatprep.subr.mxu0 0.0
    %337 = vmatpush1.msra.mxu0 %v306
    %338 = vmatprep.subr.mxu0 0.0
    %339 = vmatpush1.msra.mxu0 %v274
    %340 = vmatprep.subr.mxu0 0.0
    %341 = vmatpush2.msra.mxu0 0.0
    %342 = vmatprep.subr.mxu0 0.0
    %343 = vmatpush2.msra.mxu0 0.0
    %344 = vmatprep.subr.mxu0 0.0
    %345 = vmatpush2.msra.mxu0 0.0
    %346 = vmatprep.subr.mxu0 0.0
    %347 = vmatpush2.msra.mxu0 0.0
    %348 = vmatprep.subr.mxu0 0.0
    %349 = vmatpush2.msra.mxu0 0.0
    %350 = vmatprep.subr.mxu0 0.0
    %351 = vmatpush2.msra.mxu0 0.0
    %352 = vmatprep.subr.mxu0 0.0
    %353 = vmatpush2.msra.mxu0 0.0
    %354 = vmatprep.subr.mxu0 0.0
    %355 = vmatpush2.msra.mxu0 0.0
    %356 = vmatprep.subr.mxu0 0.0
    %357 = vmatpush2.msra.mxu0 0.0
    %358 = vmatprep.subr.mxu0 0.0
    %359 = vmatpush2.msra.mxu0 0.0
    %360 = vmatprep.subr.mxu0 0.0
    %361 = vmatpush2.msra.mxu0 0.0
    %362 = vmatprep.subr.mxu0 0.0
    %363 = vmatpush2.msra.mxu0 0.0
    %364 = vmatprep.subr.mxu0 0.0
    %365 = vmatpush2.msra.mxu0 0.0
    %366 = vmatprep.subr.mxu0 0.0
    %367 = vmatpush2.msra.mxu0 0.0
    %368 = vmatprep.subr.mxu0 0.0
    %369 = vmatpush2.msra.mxu0 0.0
    %370 = vmatprep.subr.mxu0 0.0
    %371 = vmatpush2.msra.mxu0 0.0
    %372 = vmatprep.mubr.f32.mxu0 0.0
    %373 = vmatmul.mubr.f32.gmra.mxu0 %v281
    %v374 = vpop.f32.mrf.mxu0
    %v375 = vadd.f32 %v279, %v374
    %v376 = vpop.f32.mrf.mxu0
    %377 = vmatprep.mubr.f32.mxu0 0.0
    %378 = vmatmul.mubr.f32.gmra.mxu0 %v284
    %v379 = vpop.f32.mrf.mxu0
    %v380 = vadd.f32 %v279, %v379
    %v381 = vpop.f32.mrf.mxu0
    %382 = vmatprep.mubr.f32.mxu0 0.0
    %383 = vmatmul.mubr.f32.gmra.mxu0 %v287
    %v384 = vpop.f32.mrf.mxu0
    %v385 = vadd.f32 %v279, %v384
    %v386 = vpop.f32.mrf.mxu0
    %387 = vmatprep.mubr.f32.mxu0 0.0
    %388 = vmatmul.mubr.f32.gmra.mxu0 %v290
    %v389 = vpop.f32.mrf.mxu0
    %v390 = vadd.f32 %v279, %v389
    %v391 = vpop.f32.mrf.mxu0
    %392 = vmatprep.mubr.f32.mxu0 0.0
    %393 = vmatmul.mubr.f32.gmra.mxu0 %v293
    %v394 = vpop.f32.mrf.mxu0
    %v395 = vadd.f32 %v279, %v394
    %v396 = vpop.f32.mrf.mxu0
    %397 = vmatprep.mubr.f32.mxu0 0.0
    %398 = vmatmul.mubr.f32.gmra.mxu0 %v296
    %v399 = vpop.f32.mrf.mxu0
    %v400 = vadd.f32 %v279, %v399
    %v401 = vpop.f32.mrf.mxu0
    %402 = vmatprep.mubr.f32.mxu0 0.0
    %403 = vmatmul.mubr.f32.gmra.mxu0 %v299
    %v404 = vpop.f32.mrf.mxu0
    %v405 = vadd.f32 %v279, %v404
    %v406 = vpop.f32.mrf.mxu0
    %407 = vmatprep.mubr.f32.mxu0 0.0
    %408 = vmatmul.mubr.f32.gmra.mxu0 %v302
    %v409 = vpop.f32.mrf.mxu0
    %v410 = vadd.f32 %v279, %v409
    %v411 = vpop.f32.mrf.mxu0
    %412 = vdwg.mxu0
    %v413 = vmax.f32 %v375, 0.0
    %v414 = vmax.f32 %v380, 0.0
    %v415 = vmax.f32 %v385, 0.0
    %v416 = vmax.f32 %v390, 0.0
    %v417 = vmax.f32 %v395, 0.0
    %v418 = vmax.f32 %v400, 0.0
    %v419 = vmax.f32 %v405, 0.0
    %v420 = vmax.f32 %v410, 0.0
    %v421 = vld [vmem:[%s4] sm:$0xff]
    %v422 = vld [vmem:[%s4 + $0x8] sm:$0xff]
    %v423 = vld [vmem:[%s4 + $0x10] sm:$0xff]
    %v424 = vld [vmem:[%s4 + $0x18] sm:$0xff]
    %v425 = vld [vmem:[%s4 + $0x20] sm:$0xff]
    %v426 = vld [vmem:[%s4 + $0x28] sm:$0xff]
    %v427 = vld [vmem:[%s4 + $0x30] sm:$0xff]
    %v428 = vld [vmem:[%s4 + $0x38] sm:$0xff]
    %v429 = vld [vmem:[%s4 + $0x40] sm:$0xff]
    %v430 = vld [vmem:[%s4 + $0x48] sm:$0xff]
    %v431 = vld [vmem:[%s4 + $0x50] sm:$0xff]
    %v432 = vld [vmem:[%s4 + $0x58] sm:$0xff]
    %v433 = vld [vmem:[%s4 + $0x60] sm:$0xff]
    %v434 = vld [vmem:[%s4 + $0x68] sm:$0xff]
    %v435 = vld [vmem:[%s4 + $0x70] sm:$0xff]
    %v436 = vld [vmem:[%s4 + $0x78] sm:$0xff]
    %v437 = vlaneseq
    %v438 = vshrl.u32 %v437, 7
    %v439 = vsub.s32 0, %v438
    %v440 = vrot.slane %v44, %v439
    %441 = vmatprep.subr.mxu0 0.0
    %442 = vmatpush1.msra.mxu0 %v436
    %443 = vmatprep.subr.mxu0 0.0
    %444 = vmatpush1.msra.mxu0 %v435
    %445 = vmatprep.subr.mxu0 0.0
    %446 = vmatpush1.msra.mxu0 %v434
    %447 = vmatprep.subr.mxu0 0.0
    %448 = vmatpush1.msra.mxu0 %v433
    %449 = vmatprep.subr.mxu0 0.0
    %450 = vmatpush1.msra.mxu0 %v432
    %451 = vmatprep.subr.mxu0 0.0
    %452 = vmatpush1.msra.mxu0 %v431
    %453 = vmatprep.subr.mxu0 0.0
    %454 = vmatpush1.msra.mxu0 %v430
    %455 = vmatprep.subr.mxu0 0.0
    %456 = vmatpush1.msra.mxu0 %v429
    %457 = vmatprep.subr.mxu0 0.0
    %458 = vmatpush1.msra.mxu0 %v428
    %459 = vmatprep.subr.mxu0 0.0
    %460 = vmatpush1.msra.mxu0 %v427
    %461 = vmatprep.subr.mxu0 0.0
    %462 = vmatpush1.msra.mxu0 %v426
    %463 = vmatprep.subr.mxu0 0.0
    %464 = vmatpush1.msra.mxu0 %v425
    %465 = vmatprep.subr.mxu0 0.0
    %466 = vmatpush1.msra.mxu0 %v424
    %467 = vmatprep.subr.mxu0 0.0
    %468 = vmatpush1.msra.mxu0 %v423
    %469 = vmatprep.subr.mxu0 0.0
    %470 = vmatpush1.msra.mxu0 %v422
    %471 = vmatprep.subr.mxu0 0.0
    %472 = vmatpush1.msra.mxu0 %v421
    %473 = vmatprep.subr.mxu0 0.0
    %474 = vmatpush2.msra.mxu0 0.0
    %475 = vmatprep.subr.mxu0 0.0
    %476 = vmatpush2.msra.mxu0 0.0
    %477 = vmatprep.subr.mxu0 0.0
    %478 = vmatpush2.msra.mxu0 0.0
    %479 = vmatprep.subr.mxu0 0.0
    %480 = vmatpush2.msra.mxu0 0.0
    %481 = vmatprep.subr.mxu0 0.0
    %482 = vmatpush2.msra.mxu0 0.0
    %483 = vmatprep.subr.mxu0 0.0
    %484 = vmatpush2.msra.mxu0 0.0
    %485 = vmatprep.subr.mxu0 0.0
    %486 = vmatpush2.msra.mxu0 0.0
    %487 = vmatprep.subr.mxu0 0.0
    %488 = vmatpush2.msra.mxu0 0.0
    %489 = vmatprep.subr.mxu0 0.0
    %490 = vmatpush2.msra.mxu0 0.0
    %491 = vmatprep.subr.mxu0 0.0
    %492 = vmatpush2.msra.mxu0 0.0
    %493 = vmatprep.subr.mxu0 0.0
    %494 = vmatpush2.msra.mxu0 0.0
    %495 = vmatprep.subr.mxu0 0.0
    %496 = vmatpush2.msra.mxu0 0.0
    %497 = vmatprep.subr.mxu0 0.0
    %498 = vmatpush2.msra.mxu0 0.0
    %499 = vmatprep.subr.mxu0 0.0
    %500 = vmatpush2.msra.mxu0 0.0
    %501 = vmatprep.subr.mxu0 0.0
    %502 = vmatpush2.msra.mxu0 0.0
    %503 = vmatprep.subr.mxu0 0.0
    %504 = vmatpush2.msra.mxu0 0.0
    %505 = vmatprep.mubr.f32.mxu0 0.0
    %506 = vmatmul.mubr.f32.gmra.mxu0 %v413
    %v507 = vpop.f32.mrf.mxu0
    %v508 = vadd.f32 %v440, %v507
    %v509 = vpop.f32.mrf.mxu0
    %510 = vmatprep.mubr.f32.mxu0 0.0
    %511 = vmatmul.mubr.f32.gmra.mxu0 %v414
    %v512 = vpop.f32.mrf.mxu0
    %v513 = vadd.f32 %v440, %v512
    %v514 = vpop.f32.mrf.mxu0
    %515 = vmatprep.mubr.f32.mxu0 0.0
    %516 = vmatmul.mubr.f32.gmra.mxu0 %v415
    %v517 = vpop.f32.mrf.mxu0
    %v518 = vadd.f32 %v440, %v517
    %v519 = vpop.f32.mrf.mxu0
    %520 = vmatprep.mubr.f32.mxu0 0.0
    %521 = vmatmul.mubr.f32.gmra.mxu0 %v416
    %v522 = vpop.f32.mrf.mxu0
    %v523 = vadd.f32 %v440, %v522
    %v524 = vpop.f32.mrf.mxu0
    %525 = vmatprep.mubr.f32.mxu0 0.0
    %526 = vmatmul.mubr.f32.gmra.mxu0 %v417
    %v527 = vpop.f32.mrf.mxu0
    %v528 = vadd.f32 %v440, %v527
    %v529 = vpop.f32.mrf.mxu0
    %530 = vmatprep.mubr.f32.mxu0 0.0
    %531 = vmatmul.mubr.f32.gmra.mxu0 %v418
    %v532 = vpop.f32.mrf.mxu0
    %v533 = vadd.f32 %v440, %v532
    %v534 = vpop.f32.mrf.mxu0
    %535 = vmatprep.mubr.f32.mxu0 0.0
    %536 = vmatmul.mubr.f32.gmra.mxu0 %v419
    %v537 = vpop.f32.mrf.mxu0
    %v538 = vadd.f32 %v440, %v537
    %v539 = vpop.f32.mrf.mxu0
    %540 = vmatprep.mubr.f32.mxu0 0.0
    %541 = vmatmul.mubr.f32.gmra.mxu0 %v420
    %v542 = vpop.f32.mrf.mxu0
    %v543 = vadd.f32 %v440, %v542
    %v544 = vpop.f32.mrf.mxu0
    %545 = vdwg.mxu0
    %v546 = vmax.f32 %v508, 0.0
    %v547 = vmax.f32 %v513, 0.0
    %v548 = vmax.f32 %v518, 0.0
    %v549 = vmax.f32 %v523, 0.0
    %v550 = vmax.f32 %v528, 0.0
    %v551 = vmax.f32 %v533, 0.0
    %v552 = vmax.f32 %v538, 0.0
    %v553 = vmax.f32 %v543, 0.0
    %v554 = vlaneseq
    %v555 = vshrl.u32 %v554, 7
    %v556 = vsub.s32 0, %v555
    %v557 = vrot.slane %v45, %v556
    %v558 = vmul.f32 %v546, %v557
    %v559 = vmul.f32 %v547, %v557
    %v560 = vmul.f32 %v548, %v557
    %v561 = vmul.f32 %v549, %v557
    %v562 = vmul.f32 %v550, %v557
    %v563 = vmul.f32 %v551, %v557
    %v564 = vmul.f32 %v552, %v557
    %v565 = vmul.f32 %v553, %v557
    %vm566 = vcmask 523264
    %v567 = vsel %vm566, %v558, 0.0
    %568 = vadd.xlane.f32.xlu0 %v567
    %v569 = vpop.xlane.xlu0 %568
    %v570 = vsel %vm566, %v559, 0.0
    %571 = vadd.xlane.f32.xlu0 %v570
    %v572 = vpop.xlane.xlu0 %571
    %v573 = vsel %vm566, %v560, 0.0
    %574 = vadd.xlane.f32.xlu0 %v573
    %v575 = vpop.xlane.xlu0 %574
    %v576 = vsel %vm566, %v561, 0.0
    %577 = vadd.xlane.f32.xlu0 %v576
    %v578 = vpop.xlane.xlu0 %577
    %v579 = vsel %vm566, %v562, 0.0
    %580 = vadd.xlane.f32.xlu0 %v579
    %v581 = vpop.xlane.xlu0 %580
    %v582 = vsel %vm566, %v563, 0.0
    %583 = vadd.xlane.f32.xlu0 %v582
    %v584 = vpop.xlane.xlu0 %583
    %v585 = vsel %vm566, %v564, 0.0
    %586 = vadd.xlane.f32.xlu0 %v585
    %v587 = vpop.xlane.xlu0 %586
    %v588 = vsel %vm566, %v565, 0.0
    %589 = vadd.xlane.f32.xlu0 %v588
    %v590 = vpop.xlane.xlu0 %589
    %v591 = vstv %s48
    %v592 = vadd.f32 %v569, %v591
    %v593 = vadd.f32 %v572, %v591
    %v594 = vadd.f32 %v575, %v591
    %v595 = vadd.f32 %v578, %v591
    %v596 = vadd.f32 %v581, %v591
    %v597 = vadd.f32 %v584, %v591
    %v598 = vadd.f32 %v587, %v591
    %v599 = vadd.f32 %v590, %v591
    %v600 = vxor.u32 %v592, 2147483648
    %v601 = vxor.u32 %v593, 2147483648
    %v602 = vxor.u32 %v594, 2147483648
    %v603 = vxor.u32 %v595, 2147483648
    %v604 = vxor.u32 %v596, 2147483648
    %v605 = vxor.u32 %v597, 2147483648
    %v606 = vxor.u32 %v598, 2147483648
    %v607 = vxor.u32 %v599, 2147483648
    %v608 = vmul.f32 %v600, 1.442695
    %v609 = vpow.pop %v608
    %v610 = vmul.f32 %v601, 1.442695
    %v611 = vpow.pop %v610
    %v612 = vmul.f32 %v602, 1.442695
    %v613 = vpow.pop %v612
    %v614 = vmul.f32 %v603, 1.442695
    %v615 = vpow.pop %v614
    %v616 = vmul.f32 %v604, 1.442695
    %v617 = vpow.pop %v616
    %v618 = vmul.f32 %v605, 1.442695
    %v619 = vpow.pop %v618
    %v620 = vmul.f32 %v606, 1.442695
    %v621 = vpow.pop %v620
    %v622 = vmul.f32 %v607, 1.442695
    %v623 = vpow.pop %v622
    %v624 = vadd.f32 %v609, 1.0
    %v625 = vadd.f32 %v611, 1.0
    %v626 = vadd.f32 %v613, 1.0
    %v627 = vadd.f32 %v615, 1.0
    %v628 = vadd.f32 %v617, 1.0
    %v629 = vadd.f32 %v619, 1.0
    %v630 = vadd.f32 %v621, 1.0
    %v631 = vadd.f32 %v623, 1.0
    %v632 = vrcp.pop %v624
    %v633 = vmul.f32 1.0, %v632
    %v634 = vrcp.pop %v625
    %v635 = vmul.f32 1.0, %v634
    %v636 = vrcp.pop %v626
    %v637 = vmul.f32 1.0, %v636
    %v638 = vrcp.pop %v627
    %v639 = vmul.f32 1.0, %v638
    %v640 = vrcp.pop %v628
    %v641 = vmul.f32 1.0, %v640
    %v642 = vrcp.pop %v629
    %v643 = vmul.f32 1.0, %v642
    %v644 = vrcp.pop %v630
    %v645 = vmul.f32 1.0, %v644
    %v646 = vrcp.pop %v631
    %v647 = vmul.f32 1.0, %v646
    %v648 = vadd.f32 %v266, %v633
    %v649 = vadd.f32 %v267, %v635
    %v650 = vadd.f32 %v268, %v637
    %v651 = vadd.f32 %v269, %v639
    %v652 = vadd.f32 %v270, %v641
    %v653 = vadd.f32 %v271, %v643
    %v654 = vadd.f32 %v272, %v645
    %v655 = vadd.f32 %v273, %v647
    %v656 = vxor.u32 %v648, 2147483648
    %v657 = vxor.u32 %v649, 2147483648
    %v658 = vxor.u32 %v650, 2147483648
    %v659 = vxor.u32 %v651, 2147483648
    %v660 = vxor.u32 %v652, 2147483648
    %v661 = vxor.u32 %v653, 2147483648
    %v662 = vxor.u32 %v654, 2147483648
    %v663 = vxor.u32 %v655, 2147483648
    %v664 = vmul.f32 %v656, 1.442695
    %v665 = vpow.pop %v664
    %v666 = vmul.f32 %v657, 1.442695
    %v667 = vpow.pop %v666
    %v668 = vmul.f32 %v658, 1.442695
    %v669 = vpow.pop %v668
    %v670 = vmul.f32 %v659, 1.442695
    %v671 = vpow.pop %v670
    %v672 = vmul.f32 %v660, 1.442695
    %v673 = vpow.pop %v672
    %v674 = vmul.f32 %v661, 1.442695
    %v675 = vpow.pop %v674
    %v676 = vmul.f32 %v662, 1.442695
    %v677 = vpow.pop %v676
    %v678 = vmul.f32 %v663, 1.442695
    %v679 = vpow.pop %v678
    %v680 = vadd.f32 %v665, 1.0
    %v681 = vadd.f32 %v667, 1.0
    %v682 = vadd.f32 %v669, 1.0
    %v683 = vadd.f32 %v671, 1.0
    %v684 = vadd.f32 %v673, 1.0
    %v685 = vadd.f32 %v675, 1.0
    %v686 = vadd.f32 %v677, 1.0
    %v687 = vadd.f32 %v679, 1.0
    %v688 = vrcp.pop %v680
    %v689 = vmul.f32 1.0, %v688
    %v690 = vrcp.pop %v681
    %v691 = vmul.f32 1.0, %v690
    %v692 = vrcp.pop %v682
    %v693 = vmul.f32 1.0, %v692
    %v694 = vrcp.pop %v683
    %v695 = vmul.f32 1.0, %v694
    %v696 = vrcp.pop %v684
    %v697 = vmul.f32 1.0, %v696
    %v698 = vrcp.pop %v685
    %v699 = vmul.f32 1.0, %v698
    %v700 = vrcp.pop %v686
    %v701 = vmul.f32 1.0, %v700
    %v702 = vrcp.pop %v687
    %v703 = vmul.f32 1.0, %v702
    %712 = vset.pattern.permute.xlu0 0
    %713 = vperm.xlu0 %712, %v689
    %v714 = vpop.permute.xlu0 %713
    %715 = vset.pattern.permute.xlu0 0
    %716 = vperm.xlu0 %715, %v691
    %v717 = vpop.permute.xlu0 %716
    %718 = vset.pattern.permute.xlu0 0
    %719 = vperm.xlu0 %718, %v693
    %v720 = vpop.permute.xlu0 %719
    %721 = vset.pattern.permute.xlu0 0
    %722 = vperm.xlu0 %721, %v695
    %v723 = vpop.permute.xlu0 %722
    %724 = vset.pattern.permute.xlu0 0
    %725 = vperm.xlu0 %724, %v697
    %v726 = vpop.permute.xlu0 %725
    %727 = vset.pattern.permute.xlu0 0
    %728 = vperm.xlu0 %727, %v699
    %v729 = vpop.permute.xlu0 %728
    %730 = vset.pattern.permute.xlu0 0
    %731 = vperm.xlu0 %730, %v701
    %v732 = vpop.permute.xlu0 %731
    %733 = vset.pattern.permute.xlu0 0
    %734 = vperm.xlu0 %733, %v703
    %v735 = vpop.permute.xlu0 %734
    %v736 = vlaneseq
    %v737 = vand.u32 %v736, 127
    %v738 = vlaneseq
    %v739 = vshrl.u32 %v738, 7
    %v740 = vsub.s32 %v737, %v739
    %v741 = vrot.slane %v714, %v740
    %v742 = vadd.s32 %v737, 4294967288
    %v743 = vlaneseq
    %v744 = vshrl.u32 %v743, 7
    %v745 = vsub.s32 %v742, %v744
    %v746 = vrot.slane %v717, %v745
    %vm747 = vcmask 130112
    %v748 = vsel %vm747, %v746, %v741
    %v749 = vadd.s32 %v737, 4294967280
    %v750 = vlaneseq
    %v751 = vshrl.u32 %v750, 7
    %v752 = vsub.s32 %v749, %v751
    %v753 = vrot.slane %v720, %v752
    %vm754 = vcmask 195712
    %v755 = vsel %vm754, %v753, %v748
    %v756 = vadd.s32 %v737, 4294967272
    %v757 = vlaneseq
    %v758 = vshrl.u32 %v757, 7
    %v759 = vsub.s32 %v756, %v758
    %v760 = vrot.slane %v723, %v759
    %vm761 = vcmask 261312
    %v762 = vsel %vm761, %v760, %v755
    %v763 = vadd.s32 %v737, 4294967264
    %v764 = vlaneseq
    %v765 = vshrl.u32 %v764, 7
    %v766 = vsub.s32 %v763, %v765
    %v767 = vrot.slane %v726, %v766
    %vm768 = vcmask 326912
    %v769 = vsel %vm768, %v767, %v762
    %v770 = vadd.s32 %v737, 4294967256
    %v771 = vlaneseq
    %v772 = vshrl.u32 %v771, 7
    %v773 = vsub.s32 %v770, %v772
    %v774 = vrot.slane %v729, %v773
    %vm775 = vcmask 392512
    %v776 = vsel %vm775, %v774, %v769
    %v777 = vadd.s32 %v737, 4294967248
    %v778 = vlaneseq
    %v779 = vshrl.u32 %v778, 7
    %v780 = vsub.s32 %v777, %v779
    %v781 = vrot.slane %v732, %v780
    %vm782 = vcmask 458112
    %v783 = vsel %vm782, %v781, %v776
    %v784 = vadd.s32 %v737, 4294967240
    %v785 = vlaneseq
    %v786 = vshrl.u32 %v785, 7
    %v787 = vsub.s32 %v784, %v786
    %v788 = vrot.slane %v735, %v787
    %vm789 = vcmask 523712
    %v790 = vsel %vm789, %v788, %v783
    %v792 = vsel %vm566, %v790, 0.0
    %793 = vst [vmem:[#allocation5] sm:$0x1] %v792
    // Predicated region
    $region26: #{tpu_custom_call.1} parent=1 // pred_check
      _
    $region27: #{tpu_custom_call.1} parent=1 // pred_check_branch
      %795 = sbr.rel (0) target = $region29
    $region28: #{tpu_custom_call.1} parent=1 // pred_region
      %s797 = ssub.s32 16, 16
      %798 = vsyncadd [#allocation3], %s797
      %s800 = sshll.u32 [#allocation5], 4
      %s801 = int_to_ptr.vmem [resolvable:$true] %s800
      %803 = dma.vmem_to_hbm [thread:$0]  %s801, 16, %s5, [#allocation3]
    $region29: #{tpu_custom_call.1} parent=1 // pred_fallthru
      _
    // Predicated region
    $region30: #{tpu_custom_call.1} parent=1 // pred_check
      _
    $region31: #{tpu_custom_call.1} parent=1 // pred_check_branch
      %805 = sbr.rel (0) target = $region33
    $region32: #{tpu_custom_call.1} parent=1 // pred_region
      %806 = dma.done [#allocation3], 16
    $region33: #{tpu_custom_call.1} parent=1 // pred_fallthru
      _
    %807 = vsyncpa [#allocation3], 1
    %808 = vsyncpa [#allocation4], 1

</llo_original>
